<compile_context>
chip_gen: v7x
topology: tpu7x:2x2x1
jax: 0.10.0
libtpu: 0.0.40
codegen_flags: <defaults>
</compile_context>

<pallas_src>
import jax
import jax.numpy as jnp
from jax.experimental import pallas as pl
from jax.experimental.pallas import tpu as pltpu


# ---------------------------------------------------------------------------
# helpers
# ---------------------------------------------------------------------------

def _pick_batch_block(n, per_item_bytes, budget_bytes=2 * 1024 * 1024):
    """Largest divisor of n that (a) keeps the block within a small VMEM budget
    and (b) leaves >= 2 grid steps when n >= 2 (both v7x TensorCores busy)."""
    best = 1
    for nb in range(1, n + 1):
        if n % nb:
            continue
        if nb * per_item_bytes > budget_bytes:
            continue
        if n >= 2 and (n // nb) < 2:
            continue
        best = nb
    return best


def _interp_matrix_align_corners(out_size, in_size):
    """(out_size, in_size) bilinear interpolation matrix, align_corners=True."""
    if in_size == 1:
        return jnp.ones((out_size, 1), jnp.float32)
    if out_size == 1:
        return jnp.zeros((1, in_size), jnp.float32).at[0, 0].set(1.0)
    src = jnp.arange(out_size, dtype=jnp.float32) * ((in_size - 1) / (out_size - 1))
    lo = jnp.clip(jnp.floor(src).astype(jnp.int32), 0, in_size - 2)
    frac = src - lo.astype(jnp.float32)
    rows = jnp.arange(out_size)
    m = jnp.zeros((out_size, in_size), jnp.float32)
    m = m.at[rows, lo].add(1.0 - frac)
    m = m.at[rows, lo + 1].add(frac)
    return m


# ---------------------------------------------------------------------------
# up_from_odd.forward : bilinear 2x upsample (align_corners=True) + pad + concat
# ---------------------------------------------------------------------------

def _up_kron_kernel(x1_ref, x2_ref, m_ref, o_ref):
    # x1_ref: (Nb, C1, H1*W1)   low-res features, spatial flattened (lane-dense)
    # x2_ref: (Nb, C2, H2*W2)   skip connection, spatial flattened (lane-dense)
    # m_ref : (H1*W1, H2*W2)    fused bilinear-upsample + F.pad matrix (f32)
    # o_ref : (Nb, C2 + C1, H2*W2)
    nb = x1_ref.shape[0]
    c2 = x2_ref.shape[1]

    # torch.cat([x2, x1_up], dim=1): skip connection fills the leading channels.
    # (lane-dense (C2, H2*W2) copy, no 17-lane masked stores)
    o_ref[:, :c2, :] = x2_ref[...].astype(o_ref.dtype)

    m = m_ref[...]
    for b in range(nb):  # nb is tiny and static (batch elements per block)
        # One (C1, H1*W1) @ (H1*W1, H2*W2) matmul replaces 2*C1 tiny matmuls;
        # the result is already the lane-dense flattened layout of the output.
        up = jnp.dot(x1_ref[b], m, preferred_element_type=jnp.float32)
        o_ref[b, c2:, :] = up.astype(o_ref.dtype)


def _up_separable_kernel(x1_ref, x2_ref, ah_ref, awt_ref, o_ref):
    # Fallback for very large spatial dims only (kron matrix would not fit VMEM).
    # There W2 is large (>=128), so the un-flattened NCHW output is already
    # lane-dense and each per-channel matmul has large M/N (no fill/drain issue).
    nb, c1 = x1_ref.shape[0], x1_ref.shape[1]
    c2 = x2_ref.shape[1]
    o_ref[:, :c2] = x2_ref[...].astype(o_ref.dtype)
    ah = ah_ref[...]       # (H2, H1)
    awt = awt_ref[...]     # (W1, W2)
    for b in range(nb):
        for c in range(c1):
            xc = x1_ref[b, c].astype(jnp.float32)                       # (H1, W1)
            t = jnp.dot(ah, xc, preferred_element_type=jnp.float32)     # (H2, W1)
            o_ref[b, c2 + c] = jnp.dot(
                t, awt, preferred_element_type=jnp.float32).astype(o_ref.dtype)


def up_from_odd_forward(x1, x2, *, kron_vmem_budget_bytes=8 * 1024 * 1024):
    """Matches up_from_odd.forward: NCHW in / NCHW out, channels = C2 + C1."""
    N, C1, H1, W1 = x1.shape
    N2, C2, H2, W2 = x2.shape
    if N != N2:
        raise ValueError("batch mismatch")
    Ho1, Wo1 = 2 * H1, 2 * W1
    diff_y, diff_x = H2 - Ho1, W2 - Wo1
    top, left = diff_y // 2, diff_x // 2

    # Fuse upsample + F.pad into the interpolation matrices: zero rows/cols are
    # the pad; row/col selection also handles the rare negative-pad crop case.
    a_h = _interp_matrix_align_corners(Ho1, H1)            # (2*H1, H1)
    a_w = _interp_matrix_align_corners(Wo1, W1)            # (2*W1, W1)
    lo_h, hi_h = max(top, 0), min(top + Ho1, H2)
    lo_w, hi_w = max(left, 0), min(left + Wo1, W2)
    a_h_pad = jnp.zeros((H2, H1), jnp.float32).at[lo_h:hi_h].set(
        a_h[lo_h - top:hi_h - top])                        # (H2, H1)
    a_w_pad = jnp.zeros((W2, W1), jnp.float32).at[lo_w:hi_w].set(
        a_w[lo_w - left:hi_w - left])                      # (W2, W1)

    out_dtype = jnp.promote_types(x1.dtype, x2.dtype)
    itemsize = jnp.dtype(out_dtype).itemsize
    per_img = itemsize * (C1 * H1 * W1 + (2 * C2 + C1) * H2 * W2)
    nb = _pick_batch_block(N, per_img)

    kron_bytes = (H1 * W1) * (H2 * W2) * 4
    if kron_bytes <= kron_vmem_budget_bytes:
        # Main path: M[h1*W1+w1, h2*W2+w2] = a_h_pad[h2, h1] * a_w_pad[w2, w1].
        # Interp matrix kept in f32 for accuracy (bf16 would add ~1e-3 rel. error).
        m = jnp.kron(a_h_pad.T, a_w_pad.T)                 # (H1*W1, H2*W2)
        x1_f = x1.reshape(N, C1, H1 * W1)                  # free (contiguous) reshapes
        x2_f = x2.reshape(N, C2, H2 * W2)
        out = pl.pallas_call(
            _up_kron_kernel,
            out_shape=jax.ShapeDtypeStruct((N, C2 + C1, H2 * W2), out_dtype),
            grid_spec=pltpu.PrefetchScalarGridSpec(
                num_scalar_prefetch=0,
                grid=(N // nb,),
                in_specs=[
                    pl.BlockSpec((nb, C1, H1 * W1), lambda n: (n, 0, 0)),
                    pl.BlockSpec((nb, C2, H2 * W2), lambda n: (n, 0, 0)),
                    pl.BlockSpec((H1 * W1, H2 * W2), lambda n: (0, 0)),
                ],
                out_specs=pl.BlockSpec((nb, C2 + C1, H2 * W2),
                                       lambda n: (n, 0, 0)),
            ),
            compiler_params=pltpu.CompilerParams(
                dimension_semantics=("parallel",)),
        )(x1_f, x2_f, m)
        return out.reshape(N, C2 + C1, H2, W2)             # free reshape back

    # Fallback (huge images): separable two-pass upsample, NCHW blocks.
    return pl.pallas_call(
        _up_separable_kernel,
        out_shape=jax.ShapeDtypeStruct((N, C2 + C1, H2, W2), out_dtype),
        grid_spec=pltpu.PrefetchScalarGridSpec(
            num_scalar_prefetch=0,
            grid=(N // nb,),
            in_specs=[
                pl.BlockSpec((nb, C1, H1, W1), lambda n: (n, 0, 0, 0)),
                pl.BlockSpec((nb, C2, H2, W2), lambda n: (n, 0, 0, 0)),
                pl.BlockSpec((H2, H1), lambda n: (0, 0)),
                pl.BlockSpec((W1, W2), lambda n: (0, 0)),
            ],
            out_specs=pl.BlockSpec((nb, C2 + C1, H2, W2),
                                   lambda n: (n, 0, 0, 0)),
        ),
        compiler_params=pltpu.CompilerParams(
            dimension_semantics=("parallel",)),
    )(x1, x2, a_h_pad, a_w_pad.T)


# ---------------------------------------------------------------------------
# _conv_bn_relu_from_odd : Conv2d(in, out, 3, padding=2) -> BatchNorm2d -> ReLU
# (sub-module of up_from_odd; eval-mode BN folded into the conv)
# ---------------------------------------------------------------------------

def _conv_bn_relu_kernel(x_ref, w_ref, b_ref, o_ref, xpf_ref):
    # x_ref  : (Nb, Cin, H, W)    NCHW input block (no wrapper transpose passes)
    # w_ref  : (9, Cout, Cin)     BN-scale-folded weights, tap (kh*3+kw) major
    # b_ref  : (Cout, 1)          folded bias = (conv_bias - mean)*scale + beta (f32)
    # o_ref  : (Nb, Cout, Ho*Wo)  lane-dense flattened-spatial output block
    # xpf_ref: (Cin, Hp*Wp + 4)   flat zero-padded image scratch (reused per image)
    nb, cin, h, w = x_ref.shape
    cout = w_ref.shape[1]
    pad = 2
    ho, wo = h + 2 * pad - 2, w + 2 * pad - 2
    wp = w + 2 * pad
    flat_len = xpf_ref.shape[1]

    bias = b_ref[...]                                    # (Cout, 1) f32
    w_all = w_ref[...]                                   # (9, Cout, Cin)
    zero_top = jnp.zeros((cin, 2 * wp + pad), xpf_ref.dtype)   # hoisted constants
    zero_mid = jnp.zeros((cin, 2 * pad), xpf_ref.dtype)

    # TODO(synk): for large images add a row-tile grid axis with a 2-row halo
    # (manual DMA) + vmem_limit_bytes, and switch these static unrolled loops to
    # fori_loop + pl.ds; whole-image blocks are right at these sizes (esp. v7x).
    for b in range(nb):
        # Build the zero-padded image in flat (Cin, Hp*Wp) layout.  Only the
        # 2-pixel halo is zeroed (right+left halos of adjacent rows merge into
        # one 4-wide run in flat layout); the interior is copied row by row.
        xpf_ref[:, :2 * wp + pad] = zero_top
        for r in range(h):
            base = (pad + r) * wp + pad
            xpf_ref[:, base:base + w] = x_ref[b, :, r, :]
            if r + 1 < h:
                xpf_ref[:, base + w:base + w + 2 * pad] = zero_mid
        tail = (pad + h - 1) * wp + pad + w
        xpf_ref[:, tail:] = jnp.zeros((cin, flat_len - tail), xpf_ref.dtype)

        # 9 accumulated (Cout, Cin) @ (Cin, Ho*Wp) MXU matmuls; every tap is a
        # CONTIGUOUS slice of the flat scratch (no im2col buffer, no reshape).
        # Columns Wo..Wp-1 of each Wp-row are wrap-around garbage, never stored.
        acc = jnp.broadcast_to(bias, (cout, ho * wp))    # folded BN bias as init
        for k in range(9):
            kh, kw = divmod(k, 3)
            start = kh * wp + kw
            tap = xpf_ref[:, start:start + ho * wp]      # (Cin, Ho*Wp)
            acc = acc + jnp.dot(w_all[k], tap,
                                preferred_element_type=jnp.float32)
        y = jnp.maximum(acc, 0.0)                        # ReLU (bias already in acc)

        # Drop the 2 garbage columns per row; the (Cout, Ho*Wo) output block is
        # lane-dense, so the HBM writeback is one dense DMA per image.
        for r in range(ho):
            o_ref[b, :, r * wo:(r + 1) * wo] = (
                y[:, r * wp:r * wp + wo].astype(o_ref.dtype))


def conv_bn_relu_from_odd(x_nchw, w_oihw, conv_bias, gamma, beta,
                          running_mean, running_var, eps=1e-5):
    """Forward of _conv_bn_relu_from_odd (eval-mode BN). NCHW in / NCHW out."""
    N, Cin, H, W = x_nchw.shape
    Cout = w_oihw.shape[0]
    pad = 2
    Ho, Wo = H + 2 * pad - 2, W + 2 * pad - 2          # kernel 3 -> (H+2, W+2)
    Hp, Wp = H + 2 * pad, W + 2 * pad
    dtype = x_nchw.dtype

    # Fold eval-mode BatchNorm: scale into the weights, the rest into the bias.
    scale = gamma / jnp.sqrt(running_var + eps)                       # (Cout,)
    bias = (conv_bias - running_mean) * scale + beta                  # (Cout,)
    # (Cout, Cin, 3, 3) -> (kh, kw, Cout, Cin) -> (9, Cout, Cin), tap-major.
    # NOTE: weights follow the input dtype (bf16 inputs => bf16 weights).
    w_taps = jnp.transpose(w_oihw * scale[:, None, None, None],
                           (2, 3, 0, 1)).reshape(9, Cout, Cin).astype(dtype)
    bias_col = bias.reshape(Cout, 1).astype(jnp.float32)

    itemsize = jnp.dtype(dtype).itemsize
    per_img = itemsize * (Cin * H * W + Cout * Ho * Wo)
    nb = _pick_batch_block(N, per_img)

    out_flat = pl.pallas_call(
        _conv_bn_relu_kernel,
        out_shape=jax.ShapeDtypeStruct((N, Cout, Ho * Wo), dtype),
        grid_spec=pltpu.PrefetchScalarGridSpec(
            num_scalar_prefetch=0,
            grid=(N // nb,),
            in_specs=[
                pl.BlockSpec((nb, Cin, H, W), lambda n: (n, 0, 0, 0)),
                pl.BlockSpec((9, Cout, Cin), lambda n: (0, 0, 0)),
                pl.BlockSpec((Cout, 1), lambda n: (0, 0)),
            ],
            out_specs=pl.BlockSpec((nb, Cout, Ho * Wo), lambda n: (n, 0, 0)),
            scratch_shapes=[pltpu.VMEM((Cin, Hp * Wp + 2 * pad), dtype)],
        ),
        compiler_params=pltpu.CompilerParams(
            dimension_semantics=("parallel",)),
    )(x_nchw, w_taps, bias_col)

    # Free reshape (contiguous) back to NCHW -- no transpose passes anymore.
    return out_flat.reshape(N, Cout, Ho, Wo)


# ---------------------------------------------------------------------------
# Plain-JAX references
# ---------------------------------------------------------------------------

def _up_from_odd_reference(x1, x2):
    N, C1, H1, W1 = x1.shape
    _, C2, H2, W2 = x2.shape
    Ho, Wo = 2 * H1, 2 * W1
    ys = jnp.arange(Ho, dtype=jnp.float32) * ((H1 - 1) / (Ho - 1))
    xs = jnp.arange(Wo, dtype=jnp.float32) * ((W1 - 1) / (Wo - 1))
    y0 = jnp.clip(jnp.floor(ys).astype(jnp.int32), 0, H1 - 2)
    x0 = jnp.clip(jnp.floor(xs).astype(jnp.int32), 0, W1 - 2)
    wy = (ys - y0)[None, None, :, None]
    wx = (xs - x0)[None, None, None, :]
    g = lambda yi, xi: x1[:, :, yi, :][:, :, :, xi]
    up = ((1 - wy) * (1 - wx) * g(y0, x0) + (1 - wy) * wx * g(y0, x0 + 1)
          + wy * (1 - wx) * g(y0 + 1, x0) + wy * wx * g(y0 + 1, x0 + 1))
    dy, dx = H2 - Ho, W2 - Wo
    up = jnp.pad(up, ((0, 0), (0, 0),
                      (dy // 2, dy - dy // 2), (dx // 2, dx - dx // 2)))
    return jnp.concatenate([x2, up], axis=1)


def _conv_reference(x, w, conv_bias, gamma, beta, mean, var, eps=1e-5):
    y = jax.lax.conv_general_dilated(
        x.astype(jnp.float32), w.astype(jnp.float32),
        window_strides=(1, 1), padding=[(2, 2), (2, 2)],
        dimension_numbers=("NCHW", "OIHW", "NCHW"))
    y = y + conv_bias[None, :, None, None]
    y = (y - mean[None, :, None, None]) / jnp.sqrt(var[None, :, None, None] + eps)
    y = y * gamma[None, :, None, None] + beta[None, :, None, None]
    return jnp.maximum(y, 0.0)


if __name__ == "__main__":
    key = jax.random.PRNGKey(0)
    k1, k2, kx, kw, kb, kg, kbe, km, kv = jax.random.split(key, 9)

    # --- up_from_odd.forward: bilinear 2x upsample -> pad -> channel concat ---
    N, C1, H1, W1 = 2, 4, 8, 8
    C2, H2, W2 = 4, 17, 17                    # odd skip-connection size ("from_odd")
    x1 = jax.random.normal(k1, (N, C1, H1, W1), dtype=jnp.float32)
    x2 = jax.random.normal(k2, (N, C2, H2, W2), dtype=jnp.float32)

    out_up = jax.block_until_ready(up_from_odd_forward(x1, x2))
    ref_up = _up_from_odd_reference(x1, x2)
    assert out_up.shape == (N, C2 + C1, H2, W2), out_up.shape
    assert jnp.allclose(out_up, ref_up, atol=1e-4, rtol=1e-4), \
        float(jnp.max(jnp.abs(out_up - ref_up)))

    # --- _conv_bn_relu_from_odd sub-module (conv3x3 pad=2 -> BN -> ReLU) ---
    Cin, H, W, Cout = 4, 16, 16, 8
    x = jax.random.normal(kx, (N, Cin, H, W), dtype=jnp.float32)
    w = jax.random.normal(kw, (Cout, Cin, 3, 3), dtype=jnp.float32) * 0.1
    conv_bias = jax.random.normal(kb, (Cout,), dtype=jnp.float32) * 0.1
    gamma = 1.0 + 0.1 * jax.random.normal(kg, (Cout,), dtype=jnp.float32)
    beta = 0.1 * jax.random.normal(kbe, (Cout,), dtype=jnp.float32)
    running_mean = 0.1 * jax.random.normal(km, (Cout,), dtype=jnp.float32)
    running_var = jnp.abs(jax.random.normal(kv, (Cout,), dtype=jnp.float32)) + 0.5

    out_c = jax.block_until_ready(
        conv_bn_relu_from_odd(x, w, conv_bias, gamma, beta,
                              running_mean, running_var))
    ref_c = _conv_reference(x, w, conv_bias, gamma, beta, running_mean, running_var)
    assert out_c.shape == (N, Cout, H + 2, W + 2), out_c.shape
    assert jnp.allclose(out_c, ref_c, atol=1e-4, rtol=1e-4), \
        float(jnp.max(jnp.abs(out_c - ref_c)))

    print("KERNEL_OK")
</pallas_src>

<mosaic_0001>
module attributes {stable_mosaic.version = 11 : i64} {
  func.func @_up_kron_kernel(%arg0: i32, %arg1: memref<1x4x64xf32, #tpu.memory_space<vmem>>, %arg2: memref<1x4x289xf32, #tpu.memory_space<vmem>>, %arg3: memref<64x289xf32, #tpu.memory_space<vmem>>, %arg4: memref<1x8x289xf32, #tpu.memory_space<vmem>>) attributes {dimension_semantics = [#tpu.dimension_semantics<parallel>], iteration_bounds = array<i64: 2>, scalar_prefetch = 0 : i64, scratch_operands = 0 : i64, tpu.core_type = #tpu.core_type<tc>, window_params = [{transform_indices = @transform_0, window_bounds = array<i64: 1, 4, 64>}, {transform_indices = @transform_1, window_bounds = array<i64: 1, 4, 289>}, {pipeline_mode = #tpu.pipeline_mode<synchronous>, transform_indices = @transform_2, window_bounds = array<i64: 64, 289>}, {transform_indices = @transform_3, window_bounds = array<i64: 1, 8, 289>}]} {
    %c0 = arith.constant 0 : index
    %c0_0 = arith.constant 0 : index
    %c0_1 = arith.constant 0 : index
    %0 = vector.load %arg2[%c0, %c0_0, %c0_1] : memref<1x4x289xf32, #tpu.memory_space<vmem>>, vector<1x4x289xf32>
    %c0_2 = arith.constant 0 : index
    %c0_3 = arith.constant 0 : index
    %c0_4 = arith.constant 0 : index
    %1 = vector.load %arg4[%c0_2, %c0_3, %c0_4] : memref<1x8x289xf32, #tpu.memory_space<vmem>>, vector<1x4x289xf32>
    tpu.vector_store %arg4[%c0_2, %c0_3, %c0_4], %0 {strides = array<i32>} : memref<1x8x289xf32, #tpu.memory_space<vmem>>, vector<1x4x289xf32>,
    %c0_5 = arith.constant 0 : index
    %c0_6 = arith.constant 0 : index
    %2 = vector.load %arg3[%c0_5, %c0_6] : memref<64x289xf32, #tpu.memory_space<vmem>>, vector<64x289xf32>
    %c0_7 = arith.constant 0 : index
    %c0_8 = arith.constant 0 : index
    %c0_9 = arith.constant 0 : index
    %3 = vector.load %arg1[%c0_7, %c0_8, %c0_9] : memref<1x4x64xf32, #tpu.memory_space<vmem>>, vector<1x4x64xf32>
    %4 = vector.shape_cast %3 : vector<1x4x64xf32> to vector<4x64xf32>
    %cst = arith.constant dense<0.000000e+00> : vector<4x289xf32>
    %5 = tpu.matmul %4, %2, %cst {dimension_numbers = #tpu.dot_dimension_numbers<[1], [0], [0], [1], [0, 0, 1, 1], [], []>} : vector<4x64xf32>, vector<64x289xf32>, vector<4x289xf32> -> vector<4x289xf32>
    %c0_10 = arith.constant 0 : index
    %c4 = arith.constant 4 : index
    %c0_11 = arith.constant 0 : index
    %6 = vector.load %arg4[%c0_10, %c4, %c0_11] : memref<1x8x289xf32, #tpu.memory_space<vmem>>, vector<1x4x289xf32>
    %7 = vector.shape_cast %6 : vector<1x4x289xf32> to vector<4x289xf32>
    %8 = vector.shape_cast %5 : vector<4x289xf32> to vector<1x4x289xf32>
    tpu.vector_store %arg4[%c0_10, %c4, %c0_11], %8 {strides = array<i32>} : memref<1x8x289xf32, #tpu.memory_space<vmem>>, vector<1x4x289xf32>,
    return
  }
  func.func @transform_0(%arg0: i32) -> (i32, i32, i32) {
    %c0_i32 = arith.constant 0 : i32
    %c0_i32_0 = arith.constant 0 : i32
    %c0_i32_1 = arith.constant 0 : i32
    return %arg0, %c0_i32, %c0_i32_0 : i32, i32, i32
  }
  func.func @transform_1(%arg0: i32) -> (i32, i32, i32) {
    %c0_i32 = arith.constant 0 : i32
    %c0_i32_0 = arith.constant 0 : i32
    %c0_i32_1 = arith.constant 0 : i32
    return %arg0, %c0_i32, %c0_i32_0 : i32, i32, i32
  }
  func.func @transform_2(%arg0: i32) -> (i32, i32) {
    %c0_i32 = arith.constant 0 : i32
    %c0_i32_0 = arith.constant 0 : i32
    %c0_i32_1 = arith.constant 0 : i32
    return %c0_i32, %c0_i32_0 : i32, i32
  }
  func.func @transform_3(%arg0: i32) -> (i32, i32, i32) {
    %c0_i32 = arith.constant 0 : i32
    %c0_i32_0 = arith.constant 0 : i32
    %c0_i32_1 = arith.constant 0 : i32
    return %arg0, %c0_i32, %c0_i32_0 : i32, i32, i32
  }
}

</mosaic_0001>

<llo_original>
// kernel: tpu_custom_call.1
$region0: #{tpu_custom_call.1}
  #allocation0 [shape = 'u32[]', space=smem, size = 0x4, offset = 0x4, fixed_abs, tag = 'smem constant byte address 0x4 - core index']
  #allocation1 [shape = 'u32[144,128]{1,0:T(1,128)}', space=vmem, size = 0x12000, scoped, tag = 'internal scratch']
  %s0 = inlined_call_operand.hbm [shape: f32[2,4,64], index: 0, kind: input, shape index: {}]
  %s1 = inlined_call_operand.hbm [shape: f32[2,4,289], index: 1, kind: input, shape index: {}]
  %s2 = inlined_call_operand.hbm [shape: f32[64,289], index: 2, kind: input, shape index: {}]
  %s3 = inlined_call_operand.hbm [shape: f32[2,8,289], index: 3, kind: output, shape index: {}]
  %s4 = sld [smem:[#allocation0]]
  $region57: #{tpu_custom_call.1} parent=0
    _
  %s6 = ssub.s32 1, %s4
  %s7 = scalar_select 0, %s6, %s4
  $region1: #{tpu_custom_call.1} parent=0
    #allocation2 [shape = 'u8[4096]{0}', space=vmem, size = 0x1000, scoped, tag = 'input window, operand 0']
    #allocation3 [shape = 's32[2]{0}', space=sflag, size = 0x8, scoped, tag = 'scoped memory for tpu_custom_call.1']
    #allocation4 [shape = 's32[2]{0}', space=sflag, size = 0x8, scoped, tag = 'scoped memory for tpu_custom_call.1']
    #allocation5 [shape = 'u8[12288]{0}', space=vmem, size = 0x3000, scoped, tag = 'input window, operand 1']
    #allocation6 [shape = 's32[2]{0}', space=sflag, size = 0x8, scoped, tag = 'scoped memory for tpu_custom_call.1']
    #allocation7 [shape = 'u8[98304]{0}', space=vmem, size = 0x18000, scoped, tag = 'input window, operand 2, single buffered']
    #allocation8 [shape = 'u8[24576]{0}', space=vmem, size = 0x6000, scoped, tag = 'output window, operand 0']
    %8 = vsyncpa [#allocation3], 0
    %s9 = scalar_lea.sflag [#allocation3], 1
    %10 = vsyncpa %s9, 0
    %11 = vsyncpa [#allocation6], 0
    %s12 = scalar_lea.sflag [#allocation6], 1
    %13 = vsyncpa %s12, 0
    %14 = vsyncpa [#allocation4], 0
    %s15 = scalar_lea.sflag [#allocation4], 1
    %16 = vsyncpa %s15, 0
    loop: start=0, step=1, limit=4
    $region2: #{tpu_custom_call.1} parent=1 // loop_pre_header
      _
    $region3: #{tpu_custom_call.1} parent=1 // loop_header
      %s18 = sphi 0, %s22
      %p19 = scmp.ge.s32.totalorder %s18, 4
      %s28 = sphi 0, %s30
      %s31 = sphi 0, %s28
      %s32 = sphi 0, %s31
      %s48 = sphi 0, %s32
      %s54 = sphi 0, %s56
      %s57 = sphi 0, %s54
      %s58 = sphi 0, %s57
      %s74 = sphi 0, %s58
      %s78 = sphi 0, %s78
      %s80 = sphi 0, %s78
      %s81 = sphi 0, %s80
      %s95 = sphi 0, %s81
      %s101 = sphi 0, %s103
      %s104 = sphi 0, %s101
      %s105 = sphi 0, %s104
      %s121 = sphi 0, %s105
    $region4: #{tpu_custom_call.1} parent=1 // loop_header_branch
      %21 = sbr.rel (%p19) target = $region8
    $region5: #{tpu_custom_call.1} parent=1 // loop_body
      %s23 = ssub.s32 %s18, 1
      %s24 = ssub.s32 %s18, 2
      %s25 = sadd.s32 %s18, 1
      %s26 = ssub.s32 %s18, %s25
      %p27 = scmp.eq.s32.totalorder %s26, 0
      %s29 = sadd.s32 %s28, 1
      %s30 = scalar_select %p27, %s28, %s29
      %p33 = pneg %p27
      %p34 = scmp.eq.s32.totalorder %s18, 1
      %p35 = por %p33, %p34
      %p36 = scmp.ne.s32.totalorder %s28, %s31
      %p37 = scmp.eq.s32.totalorder %s18, 0
      %p38 = por %p36, %p37
      %p39 = scmp.ne.s32.totalorder %s28, %s31
      %p40 = scmp.eq.s32.totalorder %s23, 1
      %p41 = por %p39, %p40
      %p42 = scmp.ne.s32.totalorder %s31, %s32
      %p43 = scmp.eq.s32.totalorder %s23, 0
      %p44 = por %p42, %p43
      %p45 = scmp.ne.s32.totalorder %s31, %s32
      %p46 = scmp.eq.s32.totalorder %s24, 1
      %p47 = por %p45, %p46
      %p49 = scmp.ne.s32.totalorder %s32, %s48
      %p50 = scmp.eq.s32.totalorder %s24, 0
      %p51 = por %p49, %p50
      %s52 = ssub.s32 %s18, %s25
      %p53 = scmp.eq.s32.totalorder %s52, 0
      %s55 = sadd.s32 %s54, 1
      %s56 = scalar_select %p53, %s54, %s55
      %p59 = pneg %p53
      %p60 = scmp.eq.s32.totalorder %s18, 1
      %p61 = por %p59, %p60
      %p62 = scmp.ne.s32.totalorder %s54, %s57
      %p63 = scmp.eq.s32.totalorder %s18, 0
      %p64 = por %p62, %p63
      %p65 = scmp.ne.s32.totalorder %s54, %s57
      %p66 = scmp.eq.s32.totalorder %s23, 1
      %p67 = por %p65, %p66
      %p68 = scmp.ne.s32.totalorder %s57, %s58
      %p69 = scmp.eq.s32.totalorder %s23, 0
      %p70 = por %p68, %p69
      %p71 = scmp.ne.s32.totalorder %s57, %s58
      %p72 = scmp.eq.s32.totalorder %s24, 1
      %p73 = por %p71, %p72
      %p75 = scmp.ne.s32.totalorder %s58, %s74
      %p76 = scmp.eq.s32.totalorder %s24, 0
      %p77 = por %p75, %p76
      %s79 = sadd.s32 %s78, 1
      %p82 = scmp.eq.s32.totalorder %s18, 1
      %p83 = scmp.ne.s32.totalorder %s78, %s80
      %p84 = scmp.eq.s32.totalorder %s18, 0
      %p85 = por %p83, %p84
      %p86 = scmp.ne.s32.totalorder %s78, %s80
      %p87 = scmp.eq.s32.totalorder %s23, 1
      %p88 = por %p86, %p87
      %p89 = scmp.ne.s32.totalorder %s80, %s81
      %p90 = scmp.eq.s32.totalorder %s23, 0
      %p91 = por %p89, %p90
      %p92 = scmp.ne.s32.totalorder %s80, %s81
      %p93 = scmp.eq.s32.totalorder %s24, 1
      %p94 = por %p92, %p93
      %p96 = scmp.ne.s32.totalorder %s81, %s95
      %p97 = scmp.eq.s32.totalorder %s24, 0
      %p98 = por %p96, %p97
      %s99 = ssub.s32 %s18, %s25
      %p100 = scmp.eq.s32.totalorder %s99, 0
      %s102 = sadd.s32 %s101, 1
      %s103 = scalar_select %p100, %s101, %s102
      %p106 = pneg %p100
      %p107 = scmp.eq.s32.totalorder %s18, 1
      %p108 = por %p106, %p107
      %p109 = scmp.ne.s32.totalorder %s101, %s104
      %p110 = scmp.eq.s32.totalorder %s18, 0
      %p111 = por %p109, %p110
      %p112 = scmp.ne.s32.totalorder %s101, %s104
      %p113 = scmp.eq.s32.totalorder %s23, 1
      %p114 = por %p112, %p113
      %p115 = scmp.ne.s32.totalorder %s104, %s105
      %p116 = scmp.eq.s32.totalorder %s23, 0
      %p117 = por %p115, %p116
      %p118 = scmp.ne.s32.totalorder %s104, %s105
      %p119 = scmp.eq.s32.totalorder %s24, 1
      %p120 = por %p118, %p119
      %p122 = scmp.ne.s32.totalorder %s105, %s121
      %p123 = scmp.eq.s32.totalorder %s24, 0
      %p124 = por %p122, %p123
      %p125 = scmp.le.s32.totalorder 1, %s18
      %p126 = scmp.lt.s32.totalorder %s18, 3
      %p127 = pnand %p125, %p126
      %p128 = pneg %p127
      // Predicated region
      $region9: #{tpu_custom_call.1} parent=5 // pred_check
        _
      $region10: #{tpu_custom_call.1} parent=5 // pred_check_branch
        %130 = sbr.rel (%p127) target = $region12
      $region11: #{tpu_custom_call.1} parent=5 // pred_region
        %s131 = ssub.s32 %s18, 1
        // Predicated region
        $region13: #{tpu_custom_call.1} parent=11 // pred_check
          %p132 = pneg %p91
        $region14: #{tpu_custom_call.1} parent=11 // pred_check_branch
          %134 = sbr.rel (%p132) target = $region16
        $region15: #{tpu_custom_call.1} parent=11 // pred_region
          %s136 = ssub.s32 3072, 3072
          %137 = vsyncadd [#allocation6], %s136
          %s138 = sshll.u32 [#allocation7], 4
          %s139 = int_to_ptr.vmem [resolvable:$true] %s138
          %144 = dma.hbm_to_vmem [thread:$0]  %s2, 3072, %s139, [#allocation6], 384, 384, 24
        $region16: #{tpu_custom_call.1} parent=11 // pred_fallthru
          _
      $region12: #{tpu_custom_call.1} parent=5 // pred_fallthru
        _
      %p145 = scmp.lt.s32.totalorder %s18, 2
      // Predicated region
      $region17: #{tpu_custom_call.1} parent=5 // pred_check
        %p146 = pneg %p145
      $region18: #{tpu_custom_call.1} parent=5 // pred_check_branch
        %148 = sbr.rel (%p146) target = $region20
      $region19: #{tpu_custom_call.1} parent=5 // pred_region
        // Predicated region
        $region21: #{tpu_custom_call.1} parent=19 // pred_check
          %p149 = pneg %p38
        $region22: #{tpu_custom_call.1} parent=19 // pred_check_branch
          %151 = sbr.rel (%p149) target = $region24
        $region23: #{tpu_custom_call.1} parent=19 // pred_region
          %s152 = sand.u32 %s28, 1
          %s153 = scalar_lea.sflag [#allocation3], %s152
          %s154 = sand.u32 %s28, 1
          %s155 = smul.addr %s154, 4
          %s156 = scalar_lea.vmem [#allocation2], %s155
          %s158 = ssub.s32 64, 64
          %159 = vsyncadd %s153, %s158
          %s160 = smul.addr %s18, 64
          %s161 = scalar_lea.hbm %s0, %s160
          %s163 = sshll.u32 %s156, 4
          %s164 = int_to_ptr.vmem [resolvable:$true] %s163
          %166 = dma.hbm_to_vmem [thread:$0]  %s161, 64, %s164, %s153
        $region24: #{tpu_custom_call.1} parent=19 // pred_fallthru
          _
        // Predicated region
        $region25: #{tpu_custom_call.1} parent=19 // pred_check
          %p167 = pneg %p64
        $region26: #{tpu_custom_call.1} parent=19 // pred_check_branch
          %169 = sbr.rel (%p167) target = $region28
        $region27: #{tpu_custom_call.1} parent=19 // pred_region
          %s170 = sand.u32 %s18, 1
          %s171 = scalar_lea.sflag [#allocation6], %s170
          %s172 = sand.u32 %s54, 1
          %s173 = smul.addr %s172, 12
          %s174 = scalar_lea.vmem [#allocation5], %s173
          %s176 = ssub.s32 192, 192
          %177 = vsyncadd %s171, %s176
          %s178 = smul.addr %s18, 3
          %s179 = smul.addr %s178, 64
          %s180 = scalar_lea.hbm %s1, %s179
          %s182 = sshll.u32 %s174, 4
          %s183 = int_to_ptr.vmem [resolvable:$true] %s182
          %185 = dma.hbm_to_vmem [thread:$0]  %s180, 192, %s183, %s171
        $region28: #{tpu_custom_call.1} parent=19 // pred_fallthru
          _
      $region20: #{tpu_custom_call.1} parent=5 // pred_fallthru
        _
      %p186 = scmp.le.s32.totalorder 1, %s18
      %p187 = scmp.lt.s32.totalorder %s18, 3
      %p188 = pnand %p186, %p187
      %p189 = pneg %p188
      // Predicated region
      $region29: #{tpu_custom_call.1} parent=5 // pred_check
        _
      $region30: #{tpu_custom_call.1} parent=5 // pred_check_branch
        %191 = sbr.rel (%p188) target = $region32
      $region31: #{tpu_custom_call.1} parent=5 // pred_region
        %s192 = ssub.s32 %s18, 1
        %s193 = sand.u32 %s31, 1
        %s194 = scalar_lea.sflag [#allocation3], %s193
        %s195 = sand.u32 %s31, 1
        %s196 = smul.addr %s195, 4
        %s197 = scalar_lea.vmem [#allocation2], %s196
        // Predicated region
        $region33: #{tpu_custom_call.1} parent=31 // pred_check
          %p198 = pneg %p44
        $region34: #{tpu_custom_call.1} parent=31 // pred_check_branch
          %200 = sbr.rel (%p198) target = $region36
        $region35: #{tpu_custom_call.1} parent=31 // pred_region
          %201 = dma.done %s194, 64
        $region36: #{tpu_custom_call.1} parent=31 // pred_fallthru
          _
        %s202 = sand.u32 %s23, 1
        %s203 = scalar_lea.sflag [#allocation6], %s202
        %s204 = sand.u32 %s57, 1
        %s205 = smul.addr %s204, 12
        %s206 = scalar_lea.vmem [#allocation5], %s205
        // Predicated region
        $region37: #{tpu_custom_call.1} parent=31 // pred_check
          %p207 = pneg %p70
        $region38: #{tpu_custom_call.1} parent=31 // pred_check_branch
          %209 = sbr.rel (%p207) target = $region40
        $region39: #{tpu_custom_call.1} parent=31 // pred_region
          %210 = dma.done %s203, 192
        $region40: #{tpu_custom_call.1} parent=31 // pred_fallthru
          _
        // Predicated region
        $region41: #{tpu_custom_call.1} parent=31 // pred_check
          %p211 = pneg %p91
        $region42: #{tpu_custom_call.1} parent=31 // pred_check_branch
          %213 = sbr.rel (%p211) target = $region44
        $region43: #{tpu_custom_call.1} parent=31 // pred_region
          %214 = dma.done [#allocation6], 3072
        $region44: #{tpu_custom_call.1} parent=31 // pred_fallthru
          _
        %s215 = sand.u32 %s31, 1
        %s216 = scalar_lea.sflag [#allocation3], %s215
        %s217 = sand.u32 %s31, 1
        %s218 = smul.addr %s217, 4
        %s219 = scalar_lea.vmem [#allocation2], %s218
        %p220 = pneg %p44
        %p221 = pneg %p41
        %s222 = sand.u32 %s23, 1
        %s223 = scalar_lea.sflag [#allocation6], %s222
        %s224 = sand.u32 %s57, 1
        %s225 = smul.addr %s224, 12
        %s226 = scalar_lea.vmem [#allocation5], %s225
        %p227 = pneg %p70
        %p228 = pneg %p67
        %p229 = pneg %p91
        %p230 = pneg %p88
        %p231 = pneg %p117
        %p232 = pneg %p114
        %s233 = sand.u32 %s104, 1
        %s234 = scalar_lea.sflag [#allocation4], %s233
        %s235 = sand.u32 %s104, 1
        %s236 = smul.addr %s235, 24
        %s237 = scalar_lea.vmem [#allocation8], %s236
        %v238 = vld [vmem:[%s206] sm:$0xff]
        %v239 = vld [vmem:[%s206 + $0x8] sm:$0xf]
        %v241 = vcombine.high %v238, %v238
        %243 = vst [vmem:[%s237] sm:$0xf] %v238
        %244 = vst [vmem:[%s237 + $0x8] sm:$0xf] %v241
        %vm245 = vcmask 265216
        %246 = vst.msk [vmem:[%s237 + $0x10] sm:$0xf] %vm245, %v239
        %v247 = vld [vmem:[#allocation7] sm:$0xff]
        %v248 = vld [vmem:[#allocation7 + $0x8] sm:$0xff]
        %v249 = vld [vmem:[#allocation7 + $0x10] sm:$0xff]
        %v250 = vld [vmem:[#allocation7 + $0x18] sm:$0xff]
        %v251 = vld [vmem:[#allocation7 + $0x20] sm:$0xff]
        %v252 = vld [vmem:[#allocation7 + $0x28] sm:$0xff]
        %v253 = vld [vmem:[#allocation7 + $0x30] sm:$0xff]
        %v254 = vld [vmem:[#allocation7 + $0x38] sm:$0xff]
        %v255 = vld [vmem:[#allocation7 + $0x40] sm:$0xff]
        %v256 = vld [vmem:[#allocation7 + $0x48] sm:$0xff]
        %v257 = vld [vmem:[#allocation7 + $0x50] sm:$0xff]
        %v258 = vld [vmem:[#allocation7 + $0x58] sm:$0xff]
        %v259 = vld [vmem:[#allocation7 + $0x60] sm:$0xff]
        %v260 = vld [vmem:[#allocation7 + $0x68] sm:$0xff]
        %v261 = vld [vmem:[#allocation7 + $0x70] sm:$0xff]
        %v262 = vld [vmem:[#allocation7 + $0x78] sm:$0xff]
        %v263 = vld [vmem:[#allocation7 + $0x80] sm:$0xff]
        %v264 = vld [vmem:[#allocation7 + $0x88] sm:$0xff]
        %v265 = vld [vmem:[#allocation7 + $0x90] sm:$0xff]
        %v266 = vld [vmem:[#allocation7 + $0x98] sm:$0xff]
        %v267 = vld [vmem:[#allocation7 + $0xa0] sm:$0xff]
        %v268 = vld [vmem:[#allocation7 + $0xa8] sm:$0xff]
        %v269 = vld [vmem:[#allocation7 + $0xb0] sm:$0xff]
        %v270 = vld [vmem:[#allocation7 + $0xb8] sm:$0xff]
        %v271 = vld [vmem:[%s197] sm:$0xf]
        %vm272 = vcmask 523264
        %v274 = vsel %vm272, %v271, 0
        %276 = vmatprep.subr.mxu0 %v248
        %277 = vmatpush1.msra.mxu0 %v247
        %278 = vmatprep.subr.mxu0 %v251
        %279 = vmatpush1.msra.mxu0 %v250
        %280 = vmatprep.subr.mxu0 %v254
        %281 = vmatpush1.msra.mxu0 %v253
        %282 = vmatprep.subr.mxu0 %v257
        %283 = vmatpush1.msra.mxu0 %v256
        %284 = vmatprep.subr.mxu0 %v260
        %285 = vmatpush1.msra.mxu0 %v259
        %286 = vmatprep.subr.mxu0 %v263
        %287 = vmatpush1.msra.mxu0 %v262
        %288 = vmatprep.subr.mxu0 %v266
        %289 = vmatpush1.msra.mxu0 %v265
        %290 = vmatprep.subr.mxu0 %v269
        %291 = vmatpush1.msra.mxu0 %v268
        %292 = vmatprep.subr.mxu0 0.0
        %293 = vmatpush1.msra.mxu0 0.0
        %294 = vmatprep.subr.mxu0 0.0
        %295 = vmatpush1.msra.mxu0 0.0
        %296 = vmatprep.subr.mxu0 0.0
        %297 = vmatpush1.msra.mxu0 0.0
        %298 = vmatprep.subr.mxu0 0.0
        %299 = vmatpush1.msra.mxu0 0.0
        %300 = vmatprep.subr.mxu0 0.0
        %301 = vmatpush1.msra.mxu0 0.0
        %302 = vmatprep.subr.mxu0 0.0
        %303 = vmatpush1.msra.mxu0 0.0
        %304 = vmatprep.subr.mxu0 0.0
        %305 = vmatpush1.msra.mxu0 0.0
        %306 = vmatprep.subr.mxu0 0.0
        %307 = vmatpush1.msra.mxu0 0.0
        %308 = vmatprep.subr.mxu0 0.0
        %309 = vmatpush1.msra.mxu0 0.0
        %310 = vmatprep.subr.mxu0 0.0
        %311 = vmatpush1.msra.mxu0 0.0
        %312 = vmatprep.subr.mxu0 0.0
        %313 = vmatpush1.msra.mxu0 0.0
        %314 = vmatprep.subr.mxu0 0.0
        %315 = vmatpush1.msra.mxu0 0.0
        %316 = vmatprep.subr.mxu0 0.0
        %317 = vmatpush1.msra.mxu0 0.0
        %318 = vmatprep.subr.mxu0 0.0
        %319 = vmatpush1.msra.mxu0 0.0
        %320 = vmatprep.subr.mxu0 0.0
        %321 = vmatpush1.msra.mxu0 0.0
        %322 = vmatprep.subr.mxu0 0.0
        %323 = vmatpush1.msra.mxu0 0.0
        %324 = vmatprep.subr.mxu0 0.0
        %325 = vmatpush1.msra.mxu0 0.0
        %326 = vmatprep.subr.mxu0 0.0
        %327 = vmatpush1.msra.mxu0 0.0
        %328 = vmatprep.subr.mxu0 0.0
        %329 = vmatpush1.msra.mxu0 0.0
        %330 = vmatprep.subr.mxu0 0.0
        %331 = vmatpush1.msra.mxu0 0.0
        %332 = vmatprep.subr.mxu0 0.0
        %333 = vmatpush1.msra.mxu0 0.0
        %334 = vmatprep.subr.mxu0 0.0
        %335 = vmatpush1.msra.mxu0 0.0
        %336 = vmatprep.subr.mxu0 0.0
        %337 = vmatpush1.msra.mxu0 0.0
        %338 = vmatprep.subr.mxu0 0.0
        %339 = vmatpush1.msra.mxu0 0.0
        %340 = vmatprep.mubr.f32.mxu0 0.0
        %341 = vmatmul.mubr.f32.gmra.mrb[0].mxu0 %v274
        %v342 = vpop.f32.mrb[0].mxu0
        %v343 = vadd.f32 0.0, %v342
        %v344 = vpop.f32.mrb[0].mxu0
        %v345 = vadd.f32 0.0, %v344
        %346 = vdwg.mxu0
        %347 = vmatprep.subr.mxu0 0.0
        %348 = vmatpush1.msra.mxu0 %v249
        %349 = vmatprep.subr.mxu0 0.0
        %350 = vmatpush1.msra.mxu0 %v252
        %351 = vmatprep.subr.mxu0 0.0
        %352 = vmatpush1.msra.mxu0 %v255
        %353 = vmatprep.subr.mxu0 0.0
        %354 = vmatpush1.msra.mxu0 %v258
        %355 = vmatprep.subr.mxu0 0.0
        %356 = vmatpush1.msra.mxu0 %v261
        %357 = vmatprep.subr.mxu0 0.0
        %358 = vmatpush1.msra.mxu0 %v264
        %359 = vmatprep.subr.mxu0 0.0
        %360 = vmatpush1.msra.mxu0 %v267
        %361 = vmatprep.subr.mxu0 0.0
        %362 = vmatpush1.msra.mxu0 %v270
        %363 = vmatprep.subr.mxu0 0.0
        %364 = vmatpush1.msra.mxu0 0.0
        %365 = vmatprep.subr.mxu0 0.0
        %366 = vmatpush1.msra.mxu0 0.0
        %367 = vmatprep.subr.mxu0 0.0
        %368 = vmatpush1.msra.mxu0 0.0
        %369 = vmatprep.subr.mxu0 0.0
        %370 = vmatpush1.msra.mxu0 0.0
        %371 = vmatprep.subr.mxu0 0.0
        %372 = vmatpush1.msra.mxu0 0.0
        %373 = vmatprep.subr.mxu0 0.0
        %374 = vmatpush1.msra.mxu0 0.0
        %375 = vmatprep.subr.mxu0 0.0
        %376 = vmatpush1.msra.mxu0 0.0
        %377 = vmatprep.subr.mxu0 0.0
        %378 = vmatpush1.msra.mxu0 0.0
        %379 = vmatprep.subr.mxu0 0.0
        %380 = vmatpush1.msra.mxu0 0.0
        %381 = vmatprep.subr.mxu0 0.0
        %382 = vmatpush1.msra.mxu0 0.0
        %383 = vmatprep.subr.mxu0 0.0
        %384 = vmatpush1.msra.mxu0 0.0
        %385 = vmatprep.subr.mxu0 0.0
        %386 = vmatpush1.msra.mxu0 0.0
        %387 = vmatprep.subr.mxu0 0.0
        %388 = vmatpush1.msra.mxu0 0.0
        %389 = vmatprep.subr.mxu0 0.0
        %390 = vmatpush1.msra.mxu0 0.0
        %391 = vmatprep.subr.mxu0 0.0
        %392 = vmatpush1.msra.mxu0 0.0
        %393 = vmatprep.subr.mxu0 0.0
        %394 = vmatpush1.msra.mxu0 0.0
        %395 = vmatprep.subr.mxu0 0.0
        %396 = vmatpush1.msra.mxu0 0.0
        %397 = vmatprep.subr.mxu0 0.0
        %398 = vmatpush1.msra.mxu0 0.0
        %399 = vmatprep.subr.mxu0 0.0
        %400 = vmatpush1.msra.mxu0 0.0
        %401 = vmatprep.subr.mxu0 0.0
        %402 = vmatpush1.msra.mxu0 0.0
        %403 = vmatprep.subr.mxu0 0.0
        %404 = vmatpush1.msra.mxu0 0.0
        %405 = vmatprep.subr.mxu0 0.0
        %406 = vmatpush1.msra.mxu0 0.0
        %407 = vmatprep.subr.mxu0 0.0
        %408 = vmatpush1.msra.mxu0 0.0
        %409 = vmatprep.subr.mxu0 0.0
        %410 = vmatpush1.msra.mxu0 0.0
        %411 = vmatprep.mubr.f32.mxu0 0.0
        %412 = vmatmul.mubr.f32.gmra.mrb[0].mxu0 %v274
        %v413 = vpop.f32.mrb[0].mxu0
        %v414 = vadd.f32 0.0, %v413
        %v415 = vpop.f32.mrb[0].mxu0
        %416 = vdwg.mxu0
        %v420 = vrot.slane %v343, 4
        %v421 = vrot.slane %v345, 4
        %v422 = vrot.slane %v414, 4
        %426 = vst [vmem:[%s237] sm:$0xf0] %v420
        %427 = vst [vmem:[%s237 + $0x8] sm:$0xf0] %v421
        %vm428 = vcmask 269316
        %429 = vst.msk [vmem:[%s237 + $0x10] sm:$0xf0] %vm428, %v422
        %s430 = sand.u32 %s104, 1
        %s431 = scalar_lea.sflag [#allocation4], %s430
        %s432 = sand.u32 %s104, 1
        %s433 = smul.addr %s432, 24
        %s434 = scalar_lea.vmem [#allocation8], %s433
        // Predicated region
        $region45: #{tpu_custom_call.1} parent=31 // pred_check
          %p435 = pneg %p114
        $region46: #{tpu_custom_call.1} parent=31 // pred_check_branch
          %437 = sbr.rel (%p435) target = $region48
        $region47: #{tpu_custom_call.1} parent=31 // pred_region
          %s439 = ssub.s32 384, 384
          %440 = vsyncadd %s431, %s439
          %s441 = smul.addr %s23, 3
          %s442 = smul.addr %s441, 128
          %s443 = scalar_lea.hbm %s3, %s442
          %s445 = sshll.u32 %s434, 4
          %s446 = int_to_ptr.vmem [resolvable:$true] %s445
          %448 = dma.vmem_to_hbm [thread:$0]  %s446, 384, %s443, %s431
        $region48: #{tpu_custom_call.1} parent=31 // pred_fallthru
          _
      $region32: #{tpu_custom_call.1} parent=5 // pred_fallthru
        _
      %p449 = scmp.le.s32.totalorder 2, %s18
      // Predicated region
      $region49: #{tpu_custom_call.1} parent=5 // pred_check
        %p450 = pneg %p449
      $region50: #{tpu_custom_call.1} parent=5 // pred_check_branch
        %452 = sbr.rel (%p450) target = $region52
      $region51: #{tpu_custom_call.1} parent=5 // pred_region
        %s453 = ssub.s32 %s18, 2
        // Predicated region
        $region53: #{tpu_custom_call.1} parent=51 // pred_check
          %p454 = pneg %p120
        $region54: #{tpu_custom_call.1} parent=51 // pred_check_branch
          %456 = sbr.rel (%p454) target = $region56
        $region55: #{tpu_custom_call.1} parent=51 // pred_region
          %s457 = sand.u32 %s105, 1
          %s458 = scalar_lea.sflag [#allocation4], %s457
          %s459 = sand.u32 %s105, 1
          %s460 = smul.addr %s459, 24
          %s461 = scalar_lea.vmem [#allocation8], %s460
          %462 = dma.done %s458, 384
        $region56: #{tpu_custom_call.1} parent=51 // pred_fallthru
          _
      $region52: #{tpu_custom_call.1} parent=5 // pred_fallthru
        _
    $region6: #{tpu_custom_call.1} parent=1 // loop_footer
      %s22 = sadd.s32 1, %s18
    $region7: #{tpu_custom_call.1} parent=1 // loop_footer_branch
      %17 = sbr.rel target = $region3
    $region8: #{tpu_custom_call.1} parent=1 // loop_exit
      _
    %463 = vsyncpa [#allocation3], 1
    %s464 = scalar_lea.sflag [#allocation3], 1
    %465 = vsyncpa %s464, 1
    %466 = vsyncpa [#allocation6], 1
    %s467 = scalar_lea.sflag [#allocation6], 1
    %468 = vsyncpa %s467, 1
    %469 = vsyncpa [#allocation4], 1
    %s470 = scalar_lea.sflag [#allocation4], 1
    %471 = vsyncpa %s470, 1

</llo_original>
